<compile_context>
chip_gen: v7x
topology: tpu7x:2x2x1
jax: 0.10.0
libtpu: 0.0.40
codegen_flags: <defaults>
</compile_context>

<pallas_src>
import jax
import jax.numpy as jnp
from jax.experimental import pallas as pl
from jax.experimental.pallas import tpu as pltpu


def _attention_kernel(x_ref, w1_ref, b1_ref, w2_ref, o_ref):
    """One grid step processes TB batch elements.

    x_ref : (TB, S, Hp) f32    hidden-states block (streamed)
    w1_ref: (Hp, Hp)    bf16   first Linear weight, transposed to (in, out)
    b1_ref: (1, Hp)     f32    first Linear bias
    w2_ref: (1, Hp)     f32    second Linear weight as a row vector
    o_ref : (TB, Hp)    f32    attended hidden output block
    """
    TB, S, Hp = x_ref.shape
    x = x_ref[...]                                        # (TB, S, Hp) f32

    # --- Linear(H,H) + tanh: one MXU matmul with M = TB*S rows ---------------
    # Only the matmul operand is cast to bf16; accumulation stays f32.  The
    # flatten is a free view when S % 8 == 0 (f32 sublane pack); otherwise the
    # compiler materializes one in-VMEM block copy (accepted; S is NOT padded,
    # since padded positions would need -inf score masking).
    x2d = x.reshape(TB * S, Hp).astype(jnp.bfloat16)
    h = jnp.tanh(
        jnp.dot(x2d, w1_ref[...], preferred_element_type=jnp.float32)
        + b1_ref[...]
    )                                                     # (TB*S, Hp) f32

    # --- Linear(H,1): VPU multiply + lane reduce ------------------------------
    # b2 is dropped: softmax is shift-invariant, so a constant added to every
    # score cannot change the output.  (If a bundle dump ever shows VALU/XLU
    # as the binding slot, this matvec can move to the MXU as an (Hp, 128)
    # column matmul instead.)
    scores = jnp.sum(h.reshape(TB, S, Hp) * w2_ref[...], axis=-1)   # (TB, S)

    # --- softmax over the sequence axis (lane axis) ---------------------------
    m = jnp.max(scores, axis=-1, keepdims=True)           # (TB, 1)
    e = jnp.exp(scores - m)                               # (TB, S)
    # approx reciprocal runs on the EUP slot; weights sum to 1 within ~1e-3.
    attn = e * pl.reciprocal(jnp.sum(e, axis=-1, keepdims=True), approx=True)

    # --- attended hidden: sum_S (x * attn) -> (TB, Hp) ------------------------
    # x is already f32 here, so no standalone cast copy is materialized.
    o_ref[...] = jnp.sum(x * attn[:, :, None], axis=1)    # (TB, Hp) f32


def _vmem_capacity_bytes():
    """Physical VMEM of the current TPU generation (fallback: 64 MiB, v7x)."""
    try:
        cap = getattr(pltpu.get_tpu_info(), "vmem_capacity_bytes", None)
        if cap:
            return int(cap)
    except Exception:
        pass
    return 64 * 1024 * 1024


def _choose_batch_tile(B, S, Hp, vmem_cap, weight_bytes):
    """Pick the per-step batch tile TB.

    Constraints / goals:
      * output block is (TB, Hp): TB must be a multiple of 8 or equal Bp;
      * TB*S rows should fill the MXU (>=256 on v6e/v7x, >=128 on v5e);
      * per-step f32 working set (x double-buffered + ~3x f32 intermediates,
        ~5 * TB*S*Hp*4 bytes) must stay well inside VMEM;
      * at least 2 grid steps whenever B allows it, so the "parallel" batch
        axis can be sharded across both v7x TensorCores.
    """
    per_b = 5 * S * Hp * 4                       # x (2x) + ~3x f32 intermediates
    budget = max(per_b, (vmem_cap * 3) // 5 - weight_bytes)
    tb = min(max(1, budget // per_b), max(1, pl.cdiv(512, S)))  # ~512 MXU rows
    if B < 16:
        return B            # too small to split into >=2 multiple-of-8 tiles
    tb = min(tb, pl.cdiv(B, 2))                  # leave work for both v7x TCs
    tb = max(8, (tb // 8) * 8)                   # sublane constraint, out block
    return tb


def _build_attention_call(TB, S, Hp, Bp, vmem_limit, single_buffer_weights):
    def resident_spec(shape):
        zero_map = lambda b: (0,) * len(shape)
        if single_buffer_weights:
            # Constant index_map -> double-buffering is pure VMEM waste.
            return pl.BlockSpec(shape, zero_map, pipeline_mode=pl.Buffered(1))
        return pl.BlockSpec(shape, zero_map)

    return pl.pallas_call(
        _attention_kernel,
        out_shape=jax.ShapeDtypeStruct((Bp, Hp), jnp.float32),
        grid_spec=pltpu.PrefetchScalarGridSpec(
            num_scalar_prefetch=0,
            grid=(Bp // TB,),
            in_specs=[
                pl.BlockSpec((TB, S, Hp), lambda b: (b, 0, 0)),   # x (streamed)
                resident_spec((Hp, Hp)),                          # W1^T
                resident_spec((1, Hp)),                           # b1
                resident_spec((1, Hp)),                           # w2 row
            ],
            out_specs=pl.BlockSpec((TB, Hp), lambda b: (b, 0)),
        ),
        compiler_params=pltpu.CompilerParams(
            dimension_semantics=("parallel",),   # shard batch steps across TCs
            vmem_limit_bytes=vmem_limit,
        ),
    )


def attention_layer(hidden_states, w1, b1, w2, b2=None):
    """hidden_states: (B, S, H) float32 -> (B, H) float32.

    Matches nn.Sequential(Linear(H,H), Tanh(), Linear(H,1)) -> softmax over the
    sequence dim -> sum_S(hidden * attn).  b2 is accepted but unused (softmax
    shift-invariance makes it an exact no-op for the output).
    """
    B, S, H = hidden_states.shape
    Hp = ((H + 127) // 128) * 128               # lane-dense hidden dim
    vmem_cap = _vmem_capacity_bytes()
    weight_bytes = Hp * Hp * 2 + 2 * Hp * 4     # single-buffered W1^T + b1 + w2
    TB = _choose_batch_tile(B, S, Hp, vmem_cap, weight_bytes)
    Bp = pl.cdiv(B, TB) * TB

    # x stays f32 end to end (no host-side bf16 copy pass); pad only if needed.
    # Zero padding is exact: padded hidden columns stay zero through the whole
    # pipeline and padded batch rows are sliced off at the end.
    x = hidden_states.astype(jnp.float32)
    if Bp != B or Hp != H:
        x = jnp.pad(x, ((0, Bp - B), (0, 0), (0, Hp - H)))
    w1_t = jnp.pad(w1.T, ((0, Hp - H), (0, Hp - H))).astype(jnp.bfloat16)
    b1_r = jnp.pad(b1, (0, Hp - H)).reshape(1, Hp).astype(jnp.float32)
    w2_r = jnp.pad(w2.reshape(1, H), ((0, 0), (0, Hp - H))).astype(jnp.float32)

    # Honest VMEM accounting: double-buffered x and output blocks, the f32
    # in-kernel intermediates (h, exp/broadcast temps, weighted-sum product,
    # ~3x the x block) and the single-buffered resident weights.  Cap at 7/8 of
    # physical VMEM (56 MiB v7x, 112 MiB v5e/v6e) to leave compiler headroom.
    x_blk = TB * S * Hp * 4
    out_blk = TB * Hp * 4
    interm = 3 * TB * S * Hp * 4
    vmem_bytes = 2 * x_blk + 2 * out_blk + interm + weight_bytes
    vmem_limit = int(max(16 << 20,
                         min(vmem_bytes + (4 << 20), (vmem_cap * 7) // 8)))

    args = (x, w1_t, b1_r, w2_r)
    try:
        out = _build_attention_call(TB, S, Hp, Bp, vmem_limit,
                                    single_buffer_weights=True)(*args)
    except Exception:
        # Fallback for JAX versions whose pallas_call pipeline does not accept
        # pipeline_mode=pl.Buffered(1) on resident (constant-index) operands.
        out = _build_attention_call(TB, S, Hp, Bp, vmem_limit,
                                    single_buffer_weights=False)(*args)

    return out[:B, :H]


def _reference(hidden_states, w1, b1, w2, b2):
    # Pure-JAX f32 reference mirroring the PyTorch forward.
    h = jnp.tanh(hidden_states @ w1.T + b1)                   # (B, S, H)
    scores = (h @ w2.T + b2).squeeze(-1)                      # (B, S)
    attn = jax.nn.softmax(scores, axis=-1)                    # (B, S)
    return jnp.sum(hidden_states * attn[..., None], axis=1)   # (B, H)


if __name__ == "__main__":
    B, S, H = 2, 8, 32
    key = jax.random.PRNGKey(0)
    k_x, k_w1, k_b1, k_w2, k_b2 = jax.random.split(key, 5)

    hidden_states = jax.random.normal(k_x, (B, S, H), dtype=jnp.float32)
    # Deterministic params (shapes follow nn.Linear(H,H) and nn.Linear(H,1)).
    w1 = jax.random.normal(k_w1, (H, H), dtype=jnp.float32) * 0.1
    b1 = jax.random.normal(k_b1, (H,), dtype=jnp.float32) * 0.1
    w2 = jax.random.normal(k_w2, (1, H), dtype=jnp.float32) * 0.1
    b2 = jax.random.normal(k_b2, (1,), dtype=jnp.float32) * 0.1

    out = attention_layer(hidden_states, w1, b1, w2, b2)
    jax.block_until_ready(out)

    ref = _reference(hidden_states, w1, b1, w2, b2)
    assert out.shape == (B, H)
    # bf16 MXU inputs for the first Linear + approx softmax reciprocal vs an
    # all-f32 reference -> loosened tolerance (x itself is exact f32 now).
    assert jnp.allclose(out, ref, atol=2e-2, rtol=2e-2), "mismatch vs reference"

    print("KERNEL_OK")
</pallas_src>

<mosaic_0001>
module attributes {stable_mosaic.version = 11 : i64} {
  func.func @_attention_kernel(%arg0: i32, %arg1: memref<2x8x128xf32, #tpu.memory_space<vmem>>, %arg2: memref<128x128xbf16, #tpu.memory_space<vmem>>, %arg3: memref<1x128xf32, #tpu.memory_space<vmem>>, %arg4: memref<1x128xf32, #tpu.memory_space<vmem>>, %arg5: memref<2x128xf32, #tpu.memory_space<vmem>>) attributes {dimension_semantics = [#tpu.dimension_semantics<parallel>], iteration_bounds = array<i64: 1>, scalar_prefetch = 0 : i64, scratch_operands = 0 : i64, tpu.core_type = #tpu.core_type<tc>, window_params = [{transform_indices = @transform_0, window_bounds = array<i64: 2, 8, 128>}, {pipeline_mode = #tpu.pipeline_mode<synchronous>, transform_indices = @transform_1, window_bounds = array<i64: 128, 128>}, {pipeline_mode = #tpu.pipeline_mode<synchronous>, transform_indices = @transform_2, window_bounds = array<i64: 1, 128>}, {pipeline_mode = #tpu.pipeline_mode<synchronous>, transform_indices = @transform_3, window_bounds = array<i64: 1, 128>}, {transform_indices = @transform_4, window_bounds = array<i64: 2, 128>}]} {
    %c0 = arith.constant 0 : index
    %c0_0 = arith.constant 0 : index
    %c0_1 = arith.constant 0 : index
    %0 = vector.load %arg1[%c0, %c0_0, %c0_1] : memref<2x8x128xf32, #tpu.memory_space<vmem>>, vector<2x8x128xf32>
    %1 = vector.shape_cast %0 : vector<2x8x128xf32> to vector<16x128xf32>
    %2 = arith.truncf %1 : vector<16x128xf32> to vector<16x128xbf16>
    %c0_2 = arith.constant 0 : index
    %c0_3 = arith.constant 0 : index
    %3 = vector.load %arg2[%c0_2, %c0_3] : memref<128x128xbf16, #tpu.memory_space<vmem>>, vector<128x128xbf16>
    %cst = arith.constant dense<0.000000e+00> : vector<16x128xf32>
    %4 = tpu.matmul %2, %3, %cst {dimension_numbers = #tpu.dot_dimension_numbers<[1], [0], [0], [1], [0, 0, 1, 1], [], []>} : vector<16x128xbf16>, vector<128x128xbf16>, vector<16x128xf32> -> vector<16x128xf32>
    %c0_4 = arith.constant 0 : index
    %c0_5 = arith.constant 0 : index
    %5 = vector.load %arg3[%c0_4, %c0_5] : memref<1x128xf32, #tpu.memory_space<vmem>>, vector<1x128xf32>
    %6 = vector.broadcast %5 : vector<1x128xf32> to vector<16x128xf32>
    %7 = arith.addf %4, %6 : vector<16x128xf32>
    %8 = math.tanh %7 : vector<16x128xf32>
    %9 = vector.shape_cast %8 : vector<16x128xf32> to vector<2x8x128xf32>
    %c0_6 = arith.constant 0 : index
    %c0_7 = arith.constant 0 : index
    %10 = vector.load %arg4[%c0_6, %c0_7] : memref<1x128xf32, #tpu.memory_space<vmem>>, vector<1x128xf32>
    %11 = vector.shape_cast %10 : vector<1x128xf32> to vector<1x1x128xf32>
    %12 = vector.broadcast %11 : vector<1x1x128xf32> to vector<2x8x128xf32>
    %13 = arith.mulf %9, %12 : vector<2x8x128xf32>
    %cst_8 = arith.constant dense<0.000000e+00> : vector<2x8xf32>
    %14 = vector.multi_reduction <add>, %13, %cst_8 [2] : vector<2x8x128xf32> to vector<2x8xf32>
    %cst_9 = arith.constant dense<0xFF800000> : vector<2xf32>
    %15 = vector.multi_reduction <maximumf>, %14, %cst_9 [1] : vector<2x8xf32> to vector<2xf32>
    %16 = vector.shape_cast %15 : vector<2xf32> to vector<2x1xf32>
    %17 = vector.broadcast %16 : vector<2x1xf32> to vector<2x8xf32>
    %18 = arith.subf %14, %17 : vector<2x8xf32>
    %19 = math.exp %18 : vector<2x8xf32>
    %cst_10 = arith.constant dense<0.000000e+00> : vector<2xf32>
    %20 = vector.multi_reduction <add>, %19, %cst_10 [1] : vector<2x8xf32> to vector<2xf32>
    %21 = vector.shape_cast %20 : vector<2xf32> to vector<2x1xf32>
    %22 = tpu.reciprocal %21 {approx = true} : vector<2x1xf32> -> vector<2x1xf32>
    %23 = vector.broadcast %22 : vector<2x1xf32> to vector<2x8xf32>
    %24 = arith.mulf %19, %23 : vector<2x8xf32>
    %25 = vector.shape_cast %24 : vector<2x8xf32> to vector<2x8x1xf32>
    %26 = vector.broadcast %25 : vector<2x8x1xf32> to vector<2x8x128xf32>
    %27 = arith.mulf %0, %26 : vector<2x8x128xf32>
    %cst_11 = arith.constant dense<0.000000e+00> : vector<2x128xf32>
    %28 = vector.multi_reduction <add>, %27, %cst_11 [1] : vector<2x8x128xf32> to vector<2x128xf32>
    %c0_12 = arith.constant 0 : index
    %c0_13 = arith.constant 0 : index
    %29 = vector.load %arg5[%c0_12, %c0_13] : memref<2x128xf32, #tpu.memory_space<vmem>>, vector<2x128xf32>
    tpu.vector_store %arg5[%c0_12, %c0_13], %28 {strides = array<i32>} : memref<2x128xf32, #tpu.memory_space<vmem>>, vector<2x128xf32>,
    return
  }
  func.func @transform_0(%arg0: i32) -> (i32, i32, i32) {
    %c0_i32 = arith.constant 0 : i32
    %c0_i32_0 = arith.constant 0 : i32
    %c0_i32_1 = arith.constant 0 : i32
    return %arg0, %c0_i32, %c0_i32_0 : i32, i32, i32
  }
  func.func @transform_1(%arg0: i32) -> (i32, i32) {
    %c0_i32 = arith.constant 0 : i32
    %c0_i32_0 = arith.constant 0 : i32
    %c0_i32_1 = arith.constant 0 : i32
    return %c0_i32, %c0_i32_0 : i32, i32
  }
  func.func @transform_2(%arg0: i32) -> (i32, i32) {
    %c0_i32 = arith.constant 0 : i32
    %c0_i32_0 = arith.constant 0 : i32
    %c0_i32_1 = arith.constant 0 : i32
    return %c0_i32, %c0_i32_0 : i32, i32
  }
  func.func @transform_3(%arg0: i32) -> (i32, i32) {
    %c0_i32 = arith.constant 0 : i32
    %c0_i32_0 = arith.constant 0 : i32
    %c0_i32_1 = arith.constant 0 : i32
    return %c0_i32, %c0_i32_0 : i32, i32
  }
  func.func @transform_4(%arg0: i32) -> (i32, i32) {
    %c0_i32 = arith.constant 0 : i32
    %c0_i32_0 = arith.constant 0 : i32
    return %arg0, %c0_i32 : i32, i32
  }
}

module attributes {stable_mosaic.version = 11 : i64} {
  func.func @_attention_kernel(%arg0: i32, %arg1: memref<2x8x128xf32, #tpu.memory_space<vmem>>, %arg2: memref<128x128xbf16, #tpu.memory_space<vmem>>, %arg3: memref<1x128xf32, #tpu.memory_space<vmem>>, %arg4: memref<1x128xf32, #tpu.memory_space<vmem>>, %arg5: memref<2x128xf32, #tpu.memory_space<vmem>>) attributes {dimension_semantics = [#tpu.dimension_semantics<parallel>], iteration_bounds = array<i64: 1>, scalar_prefetch = 0 : i64, scratch_operands = 0 : i64, tpu.core_type = #tpu.core_type<tc>, window_params = [{transform_indices = @transform_0, window_bounds = array<i64: 2, 8, 128>}, {pipeline_mode = #tpu.pipeline_mode<synchronous>, transform_indices = @transform_1, window_bounds = array<i64: 128, 128>}, {pipeline_mode = #tpu.pipeline_mode<synchronous>, transform_indices = @transform_2, window_bounds = array<i64: 1, 128>}, {pipeline_mode = #tpu.pipeline_mode<synchronous>, transform_indices = @transform_3, window_bounds = array<i64: 1, 128>}, {transform_indices = @transform_4, window_bounds = array<i64: 2, 128>}]} {
    %c0 = arith.constant 0 : index
    %c0_0 = arith.constant 0 : index
    %c0_1 = arith.constant 0 : index
    %0 = vector.load %arg1[%c0, %c0_0, %c0_1] : memref<2x8x128xf32, #tpu.memory_space<vmem>>, vector<2x8x128xf32>
    %1 = vector.shape_cast %0 : vector<2x8x128xf32> to vector<16x128xf32>
    %2 = arith.truncf %1 : vector<16x128xf32> to vector<16x128xbf16>
    %c0_2 = arith.constant 0 : index
    %c0_3 = arith.constant 0 : index
    %3 = vector.load %arg2[%c0_2, %c0_3] : memref<128x128xbf16, #tpu.memory_space<vmem>>, vector<128x128xbf16>
    %cst = arith.constant dense<0.000000e+00> : vector<16x128xf32>
    %4 = tpu.matmul %2, %3, %cst {dimension_numbers = #tpu.dot_dimension_numbers<[1], [0], [0], [1], [0, 0, 1, 1], [], []>} : vector<16x128xbf16>, vector<128x128xbf16>, vector<16x128xf32> -> vector<16x128xf32>
    %c0_4 = arith.constant 0 : index
    %c0_5 = arith.constant 0 : index
    %5 = vector.load %arg3[%c0_4, %c0_5] : memref<1x128xf32, #tpu.memory_space<vmem>>, vector<1x128xf32>
    %6 = vector.broadcast %5 : vector<1x128xf32> to vector<16x128xf32>
    %7 = arith.addf %4, %6 : vector<16x128xf32>
    %8 = math.tanh %7 : vector<16x128xf32>
    %9 = vector.shape_cast %8 : vector<16x128xf32> to vector<2x8x128xf32>
    %c0_6 = arith.constant 0 : index
    %c0_7 = arith.constant 0 : index
    %10 = vector.load %arg4[%c0_6, %c0_7] : memref<1x128xf32, #tpu.memory_space<vmem>>, vector<1x128xf32>
    %11 = vector.shape_cast %10 : vector<1x128xf32> to vector<1x1x128xf32>
    %12 = vector.broadcast %11 : vector<1x1x128xf32> to vector<2x8x128xf32>
    %13 = arith.mulf %9, %12 : vector<2x8x128xf32>
    %cst_8 = arith.constant dense<0.000000e+00> : vector<2x8xf32>
    %14 = vector.multi_reduction <add>, %13, %cst_8 [2] : vector<2x8x128xf32> to vector<2x8xf32>
    %cst_9 = arith.constant dense<0xFF800000> : vector<2xf32>
    %15 = vector.multi_reduction <maximumf>, %14, %cst_9 [1] : vector<2x8xf32> to vector<2xf32>
    %16 = vector.shape_cast %15 : vector<2xf32> to vector<2x1xf32>
    %17 = vector.broadcast %16 : vector<2x1xf32> to vector<2x8xf32>
    %18 = arith.subf %14, %17 : vector<2x8xf32>
    %19 = math.exp %18 : vector<2x8xf32>
    %cst_10 = arith.constant dense<0.000000e+00> : vector<2xf32>
    %20 = vector.multi_reduction <add>, %19, %cst_10 [1] : vector<2x8xf32> to vector<2xf32>
    %21 = vector.shape_cast %20 : vector<2xf32> to vector<2x1xf32>
    %22 = tpu.reciprocal %21 {approx = true} : vector<2x1xf32> -> vector<2x1xf32>
    %23 = vector.broadcast %22 : vector<2x1xf32> to vector<2x8xf32>
    %24 = arith.mulf %19, %23 : vector<2x8xf32>
    %25 = vector.shape_cast %24 : vector<2x8xf32> to vector<2x8x1xf32>
    %26 = vector.broadcast %25 : vector<2x8x1xf32> to vector<2x8x128xf32>
    %27 = arith.mulf %0, %26 : vector<2x8x128xf32>
    %cst_11 = arith.constant dense<0.000000e+00> : vector<2x128xf32>
    %28 = vector.multi_reduction <add>, %27, %cst_11 [1] : vector<2x8x128xf32> to vector<2x128xf32>
    %c0_12 = arith.constant 0 : index
    %c0_13 = arith.constant 0 : index
    %29 = vector.load %arg5[%c0_12, %c0_13] : memref<2x128xf32, #tpu.memory_space<vmem>>, vector<2x128xf32>
    tpu.vector_store %arg5[%c0_12, %c0_13], %28 {strides = array<i32>} : memref<2x128xf32, #tpu.memory_space<vmem>>, vector<2x128xf32>,
    return
  }
  func.func @transform_0(%arg0: i32) -> (i32, i32, i32) {
    %c0_i32 = arith.constant 0 : i32
    %c0_i32_0 = arith.constant 0 : i32
    %c0_i32_1 = arith.constant 0 : i32
    return %arg0, %c0_i32, %c0_i32_0 : i32, i32, i32
  }
  func.func @transform_1(%arg0: i32) -> (i32, i32) {
    %c0_i32 = arith.constant 0 : i32
    %c0_i32_0 = arith.constant 0 : i32
    %c0_i32_1 = arith.constant 0 : i32
    return %c0_i32, %c0_i32_0 : i32, i32
  }
  func.func @transform_2(%arg0: i32) -> (i32, i32) {
    %c0_i32 = arith.constant 0 : i32
    %c0_i32_0 = arith.constant 0 : i32
    %c0_i32_1 = arith.constant 0 : i32
    return %c0_i32, %c0_i32_0 : i32, i32
  }
  func.func @transform_3(%arg0: i32) -> (i32, i32) {
    %c0_i32 = arith.constant 0 : i32
    %c0_i32_0 = arith.constant 0 : i32
    %c0_i32_1 = arith.constant 0 : i32
    return %c0_i32, %c0_i32_0 : i32, i32
  }
  func.func @transform_4(%arg0: i32) -> (i32, i32) {
    %c0_i32 = arith.constant 0 : i32
    %c0_i32_0 = arith.constant 0 : i32
    return %arg0, %c0_i32 : i32, i32
  }
}

</mosaic_0001>

<llo_original>
// kernel: tpu_custom_call.1
$region0: #{tpu_custom_call.1}
  #allocation0 [shape = 'u32[]', space=smem, size = 0x4, offset = 0x4, fixed_abs, tag = 'smem constant byte address 0x4 - core index']
  #allocation1 [shape = 'u32[144,128]{1,0:T(1,128)}', space=vmem, size = 0x12000, scoped, tag = 'internal scratch']
  %s0 = inlined_call_operand.hbm [shape: f32[2,8,128], index: 0, kind: input, shape index: {}]
  %s1 = inlined_call_operand.hbm [shape: bf16[128,128], index: 1, kind: input, shape index: {}]
  %s2 = inlined_call_operand.vmem [shape: f32[1,128], index: 2, kind: input, shape index: {}]
  %s3 = inlined_call_operand.vmem [shape: f32[1,128], index: 3, kind: input, shape index: {}]
  %s4 = inlined_call_operand.hbm [shape: f32[2,128], index: 4, kind: output, shape index: {}]
  %s5 = sld [smem:[#allocation0]]
  $region34: #{tpu_custom_call.1} parent=0
    _
  %s7 = ssub.s32 1, %s5
  %s8 = scalar_select 0, %s7, %s5
  $region1: #{tpu_custom_call.1} parent=0
    #allocation2 [shape = 'u8[8192]{0}', space=vmem, size = 0x2000, scoped, tag = 'input window, operand 0, single buffered']
    #allocation3 [shape = 's32[1]{0}', space=sflag, size = 0x4, scoped, tag = 'scoped memory for tpu_custom_call.1']
    #allocation4 [shape = 's32[1]{0}', space=sflag, size = 0x4, scoped, tag = 'scoped memory for tpu_custom_call.1']
    #allocation5 [shape = 'u8[32768]{0}', space=vmem, size = 0x8000, scoped, tag = 'input window, operand 1, single buffered']
    #allocation6 [shape = 's32[1]{0}', space=sflag, size = 0x4, scoped, tag = 'scoped memory for tpu_custom_call.1']
    #allocation7 [shape = 'u8[1024]{0}', space=vmem, size = 0x400, scoped, tag = 'output window, operand 0, single buffered']
    %9 = vsyncpa [#allocation3], 0
    %10 = vsyncpa [#allocation6], 0
    %11 = vsyncpa [#allocation4], 0
    // Predicated region
    $region2: #{tpu_custom_call.1} parent=1 // pred_check
      _
    $region3: #{tpu_custom_call.1} parent=1 // pred_check_branch
      %13 = sbr.rel (0) target = $region5
    $region4: #{tpu_custom_call.1} parent=1 // pred_region
      %s15 = ssub.s32 256, 256
      %16 = vsyncadd [#allocation3], %s15
      %s17 = sshll.u32 [#allocation2], 4
      %s18 = int_to_ptr.vmem [resolvable:$true] %s17
      %23 = dma.hbm_to_vmem [thread:$0]  %s0, 256, %s18, [#allocation3], 128, 128, 8
    $region5: #{tpu_custom_call.1} parent=1 // pred_fallthru
      _
    // Predicated region
    $region6: #{tpu_custom_call.1} parent=1 // pred_check
      _
    $region7: #{tpu_custom_call.1} parent=1 // pred_check_branch
      %25 = sbr.rel (0) target = $region9
    $region8: #{tpu_custom_call.1} parent=1 // pred_region
      %s27 = ssub.s32 1024, 1024
      %28 = vsyncadd [#allocation6], %s27
      %s29 = sshll.u32 [#allocation5], 4
      %s30 = int_to_ptr.vmem [resolvable:$true] %s29
      %35 = dma.hbm_to_vmem [thread:$0]  %s1, 1024, %s30, [#allocation6], 64, 64, 4
    $region9: #{tpu_custom_call.1} parent=1 // pred_fallthru
      _
    // Predicated region
    $region10: #{tpu_custom_call.1} parent=1 // pred_check
      _
    $region11: #{tpu_custom_call.1} parent=1 // pred_check_branch
      %37 = sbr.rel (0) target = $region13
    $region12: #{tpu_custom_call.1} parent=1 // pred_region
      _
    $region13: #{tpu_custom_call.1} parent=1 // pred_fallthru
      _
    // Predicated region
    $region14: #{tpu_custom_call.1} parent=1 // pred_check
      _
    $region15: #{tpu_custom_call.1} parent=1 // pred_check_branch
      %39 = sbr.rel (0) target = $region17
    $region16: #{tpu_custom_call.1} parent=1 // pred_region
      _
    $region17: #{tpu_custom_call.1} parent=1 // pred_fallthru
      _
    // Predicated region
    $region18: #{tpu_custom_call.1} parent=1 // pred_check
      _
    $region19: #{tpu_custom_call.1} parent=1 // pred_check_branch
      %41 = sbr.rel (0) target = $region21
    $region20: #{tpu_custom_call.1} parent=1 // pred_region
      %42 = dma.done [#allocation3], 256
    $region21: #{tpu_custom_call.1} parent=1 // pred_fallthru
      _
    // Predicated region
    $region22: #{tpu_custom_call.1} parent=1 // pred_check
      _
    $region23: #{tpu_custom_call.1} parent=1 // pred_check_branch
      %44 = sbr.rel (0) target = $region25
    $region24: #{tpu_custom_call.1} parent=1 // pred_region
      %45 = dma.done [#allocation6], 1024
    $region25: #{tpu_custom_call.1} parent=1 // pred_fallthru
      _
    %v47 = vld [vmem:[#allocation2] sm:$0xff]
    %v48 = vld [vmem:[#allocation2 + $0x8] sm:$0xff]
    %v49 = vpack.c.bf16 %v48, %v47
    %v50 = vld [vmem:[#allocation5] sm:$0xf]
    %v51 = vld [vmem:[#allocation5 + $0x4] sm:$0xf]
    %v52 = vld [vmem:[#allocation5 + $0x8] sm:$0xf]
    %v53 = vld [vmem:[#allocation5 + $0xc] sm:$0xf]
    %v54 = vld [vmem:[#allocation5 + $0x10] sm:$0xf]
    %v55 = vld [vmem:[#allocation5 + $0x14] sm:$0xf]
    %v56 = vld [vmem:[#allocation5 + $0x18] sm:$0xf]
    %v57 = vld [vmem:[#allocation5 + $0x1c] sm:$0xf]
    %v58 = vld [vmem:[#allocation5 + $0x20] sm:$0xf]
    %v59 = vld [vmem:[#allocation5 + $0x24] sm:$0xf]
    %v60 = vld [vmem:[#allocation5 + $0x28] sm:$0xf]
    %v61 = vld [vmem:[#allocation5 + $0x2c] sm:$0xf]
    %v62 = vld [vmem:[#allocation5 + $0x30] sm:$0xf]
    %v63 = vld [vmem:[#allocation5 + $0x34] sm:$0xf]
    %v64 = vld [vmem:[#allocation5 + $0x38] sm:$0xf]
    %v65 = vld [vmem:[#allocation5 + $0x3c] sm:$0xf]
    %v66 = vld [vmem:[%s2] sm:$0x1]
    %v68 = vlaneseq
    %v69 = vshrl.u32 %v68, 7
    %v70 = vsub.s32 0, %v69
    %v71 = vrot.slane %v66, %v70
    %v89 = vunpack.c.l.b16 %v50
    %v90 = vunpack.c.l.b16 %v51
    %v91 = vunpack.c.l.b16 %v52
    %v92 = vunpack.c.l.b16 %v53
    %v93 = vunpack.c.l.b16 %v54
    %v94 = vunpack.c.l.b16 %v55
    %v95 = vunpack.c.l.b16 %v56
    %v96 = vunpack.c.l.b16 %v57
    %v97 = vunpack.c.l.b16 %v58
    %v98 = vunpack.c.l.b16 %v59
    %v99 = vunpack.c.l.b16 %v60
    %v100 = vunpack.c.l.b16 %v61
    %v101 = vunpack.c.l.b16 %v62
    %v102 = vunpack.c.l.b16 %v63
    %v103 = vunpack.c.l.b16 %v64
    %v104 = vunpack.c.l.b16 %v65
    %v105 = vpack.c.b16 %v90, %v89
    %v106 = vpack.c.b16 %v92, %v91
    %v107 = vpack.c.b16 %v94, %v93
    %v108 = vpack.c.b16 %v96, %v95
    %v109 = vpack.c.b16 %v98, %v97
    %v110 = vpack.c.b16 %v100, %v99
    %v111 = vpack.c.b16 %v102, %v101
    %v112 = vpack.c.b16 %v104, %v103
    %121 = vmatprep.subr.bf16.mxu0 0
    %122 = vmatpush1.bf16.msra.mxu0 %v105
    %123 = vmatprep.subr.bf16.mxu0 0
    %124 = vmatpush1.bf16.msra.mxu0 %v106
    %125 = vmatprep.subr.bf16.mxu0 0
    %126 = vmatpush1.bf16.msra.mxu0 %v107
    %127 = vmatprep.subr.bf16.mxu0 0
    %128 = vmatpush1.bf16.msra.mxu0 %v108
    %129 = vmatprep.subr.bf16.mxu0 0
    %130 = vmatpush1.bf16.msra.mxu0 %v109
    %131 = vmatprep.subr.bf16.mxu0 0
    %132 = vmatpush1.bf16.msra.mxu0 %v110
    %133 = vmatprep.subr.bf16.mxu0 0
    %134 = vmatpush1.bf16.msra.mxu0 %v111
    %135 = vmatprep.subr.bf16.mxu0 0
    %136 = vmatpush1.bf16.msra.mxu0 %v112
    %137 = vmatprep.subr.bf16.mxu0 0
    %138 = vmatpush1.bf16.msra.mxu0 0
    %139 = vmatprep.subr.bf16.mxu0 0
    %140 = vmatpush1.bf16.msra.mxu0 0
    %141 = vmatprep.subr.bf16.mxu0 0
    %142 = vmatpush1.bf16.msra.mxu0 0
    %143 = vmatprep.subr.bf16.mxu0 0
    %144 = vmatpush1.bf16.msra.mxu0 0
    %145 = vmatprep.subr.bf16.mxu0 0
    %146 = vmatpush1.bf16.msra.mxu0 0
    %147 = vmatprep.subr.bf16.mxu0 0
    %148 = vmatpush1.bf16.msra.mxu0 0
    %149 = vmatprep.subr.bf16.mxu0 0
    %150 = vmatpush1.bf16.msra.mxu0 0
    %151 = vmatprep.subr.bf16.mxu0 0
    %152 = vmatpush1.bf16.msra.mxu0 0
    %153 = vmatprep.mubr.bf16.mxu0 0
    %154 = vmatmul.mubr.bf16.gmra.mrb[0].mxu0 %v49
    %v155 = vpop.f32.mrb[0].mxu0
    %v156 = vadd.f32 %v71, %v155
    %v157 = vpop.f32.mrb[0].mxu0
    %v158 = vpop.f32.mrb[0].mxu0
    %v159 = vadd.f32 %v71, %v158
    %v160 = vpop.f32.mrb[0].mxu0
    %161 = vdwg.mxu0
    %v162 = vtanh.pop %v156
    %v163 = vtanh.pop %v159
    %v164 = vld [vmem:[%s3] sm:$0x1]
    %v166 = vlaneseq
    %v167 = vshrl.u32 %v166, 7
    %v168 = vsub.s32 0, %v167
    %v169 = vrot.slane %v164, %v168
    %v171 = vmul.f32 %v162, %v169
    %v172 = vmul.f32 %v163, %v169
    %173 = vadd.xlane.f32.xlu0 %v171
    %v174 = vpop.xlane.xlu0 %173
    %175 = vadd.xlane.f32.xlu0 %v172
    %v176 = vpop.xlane.xlu0 %175
    %v179 = vlaneseq
    %v180 = vand.u32 %v179, 127
    %v181 = vlaneseq
    %v182 = vshrl.u32 %v181, 7
    %v183 = vsub.s32 %v180, %v182
    %v184 = vrot.slane %v174, %v183
    %v185 = vlaneseq
    %v186 = vshrl.u32 %v185, 7
    %v187 = vsub.s32 %v180, %v186
    %v188 = vrot.slane %v176, %v187
    %vm189 = vcmask 1041409
    %v190 = vsel %vm189, %v188, %v184
    %vm192 = vcmask 58368
    %v193 = vsel %vm192, %v190, -inf
    %194 = vmax.xlane.f32.xlu0 %v193
    %v195 = vpop.xlane.xlu0 %194
    %v197 = vlaneseq
    %v198 = vshrl.u32 %v197, 7
    %v199 = vsub.s32 0, %v198
    %v200 = vrot.slane %v195, %v199
    %v201 = vlaneseq
    %v202 = vshrl.u32 %v201, 7
    %v203 = vsub.s32 1, %v202
    %v204 = vrot.slane %v195, %v203
    %v207 = vsub.f32 %v174, %v200
    %v208 = vsub.f32 %v176, %v204
    %v209 = vmul.f32 %v207, 1.442695
    %v210 = vpow.pop %v209
    %v211 = vmul.f32 %v208, 1.442695
    %v212 = vpow.pop %v211
    %215 = vset.pattern.permute.xlu0 0
    %216 = vperm.xlu0 %215, %v210
    %v217 = vpop.permute.xlu0 %216
    %218 = vset.pattern.permute.xlu0 0
    %219 = vperm.xlu0 %218, %v212
    %v220 = vpop.permute.xlu0 %219
    %v221 = vlaneseq
    %v222 = vshrl.u32 %v221, 7
    %v223 = vsub.s32 %v180, %v222
    %v224 = vrot.slane %v217, %v223
    %v225 = vlaneseq
    %v226 = vshrl.u32 %v225, 7
    %v227 = vsub.s32 %v180, %v226
    %v228 = vrot.slane %v220, %v227
    %v229 = vsel %vm189, %v228, %v224
    %v231 = vsel %vm192, %v229, 0.0
    %232 = vadd.xlane.f32.xlu0 %v231
    %v233 = vpop.xlane.xlu0 %232
    %v234 = vrcp.pop %v233
    %v236 = vlaneseq
    %v237 = vshrl.u32 %v236, 7
    %v238 = vsub.s32 0, %v237
    %v239 = vrot.slane %v234, %v238
    %v240 = vlaneseq
    %v241 = vshrl.u32 %v240, 7
    %v242 = vsub.s32 1, %v241
    %v243 = vrot.slane %v234, %v242
    %v246 = vmul.f32 %v210, %v239
    %v247 = vmul.f32 %v212, %v243
    %249 = vset.pattern.permute.xlu0 0
    %250 = vperm.xlu0 %249, %v246
    %v251 = vpop.permute.xlu0 %250
    %254 = vset.pattern.permute.xlu0 0
    %255 = vperm.xlu0 %254, %v247
    %v256 = vpop.permute.xlu0 %255
    %v258 = vmul.f32 %v47, %v251
    %v259 = vmul.f32 %v48, %v256
    %v260 = vrot.slane %v258, 4
    %v261 = vadd.f32 %v258, %v260
    %v262 = vrot.slane %v261, 2
    %v263 = vadd.f32 %v261, %v262
    %v264 = vrot.slane %v263, 1
    %v265 = vadd.f32 %v263, %v264
    %v266 = vrot.slane %v259, 4
    %v267 = vadd.f32 %v259, %v266
    %v268 = vrot.slane %v267, 2
    %v269 = vadd.f32 %v267, %v268
    %v270 = vrot.slane %v269, 1
    %v271 = vadd.f32 %v269, %v270
    %v274 = vsel %vm189, %v271, %v265
    %276 = vst [vmem:[#allocation7] sm:$0x3] %v274
    // Predicated region
    $region26: #{tpu_custom_call.1} parent=1 // pred_check
      _
    $region27: #{tpu_custom_call.1} parent=1 // pred_check_branch
      %278 = sbr.rel (0) target = $region29
    $region28: #{tpu_custom_call.1} parent=1 // pred_region
      %s280 = ssub.s32 32, 32
      %281 = vsyncadd [#allocation4], %s280
      %s283 = sshll.u32 [#allocation7], 4
      %s284 = int_to_ptr.vmem [resolvable:$true] %s283
      %286 = dma.vmem_to_hbm [thread:$0]  %s284, 32, %s4, [#allocation4]
    $region29: #{tpu_custom_call.1} parent=1 // pred_fallthru
      _
    // Predicated region
    $region30: #{tpu_custom_call.1} parent=1 // pred_check
      _
    $region31: #{tpu_custom_call.1} parent=1 // pred_check_branch
      %288 = sbr.rel (0) target = $region33
    $region32: #{tpu_custom_call.1} parent=1 // pred_region
      %289 = dma.done [#allocation4], 32
    $region33: #{tpu_custom_call.1} parent=1 // pred_fallthru
      _
    %290 = vsyncpa [#allocation3], 1
    %291 = vsyncpa [#allocation6], 1
    %292 = vsyncpa [#allocation4], 1

// kernel: tpu_custom_call.1
$region0: #{tpu_custom_call.1}
  #allocation0 [shape = 'u32[]', space=smem, size = 0x4, offset = 0x4, fixed_abs, tag = 'smem constant byte address 0x4 - core index']
  #allocation1 [shape = 'u32[144,128]{1,0:T(1,128)}', space=vmem, size = 0x12000, scoped, tag = 'internal scratch']
  %s0 = inlined_call_operand.hbm [shape: f32[2,8,128], index: 0, kind: input, shape index: {}]
  %s1 = inlined_call_operand.hbm [shape: bf16[128,128], index: 1, kind: input, shape index: {}]
  %s2 = inlined_call_operand.vmem [shape: f32[1,128], index: 2, kind: input, shape index: {}]
  %s3 = inlined_call_operand.vmem [shape: f32[1,128], index: 3, kind: input, shape index: {}]
  %s4 = inlined_call_operand.hbm [shape: f32[2,128], index: 4, kind: output, shape index: {}]
  %s5 = sld [smem:[#allocation0]]
  $region34: #{tpu_custom_call.1} parent=0
    _
  %s7 = ssub.s32 1, %s5
  %s8 = scalar_select 0, %s7, %s5
  $region1: #{tpu_custom_call.1} parent=0
    #allocation2 [shape = 'u8[8192]{0}', space=vmem, size = 0x2000, scoped, tag = 'input window, operand 0, single buffered']
    #allocation3 [shape = 's32[1]{0}', space=sflag, size = 0x4, scoped, tag = 'scoped memory for tpu_custom_call.1']
    #allocation4 [shape = 's32[1]{0}', space=sflag, size = 0x4, scoped, tag = 'scoped memory for tpu_custom_call.1']
    #allocation5 [shape = 'u8[32768]{0}', space=vmem, size = 0x8000, scoped, tag = 'input window, operand 1, single buffered']
    #allocation6 [shape = 's32[1]{0}', space=sflag, size = 0x4, scoped, tag = 'scoped memory for tpu_custom_call.1']
    #allocation7 [shape = 'u8[1024]{0}', space=vmem, size = 0x400, scoped, tag = 'output window, operand 0, single buffered']
    %9 = vsyncpa [#allocation3], 0
    %10 = vsyncpa [#allocation6], 0
    %11 = vsyncpa [#allocation4], 0
    // Predicated region
    $region2: #{tpu_custom_call.1} parent=1 // pred_check
      _
    $region3: #{tpu_custom_call.1} parent=1 // pred_check_branch
      %13 = sbr.rel (0) target = $region5
    $region4: #{tpu_custom_call.1} parent=1 // pred_region
      %s15 = ssub.s32 256, 256
      %16 = vsyncadd [#allocation3], %s15
      %s17 = sshll.u32 [#allocation2], 4
      %s18 = int_to_ptr.vmem [resolvable:$true] %s17
      %23 = dma.hbm_to_vmem [thread:$0]  %s0, 256, %s18, [#allocation3], 128, 128, 8
    $region5: #{tpu_custom_call.1} parent=1 // pred_fallthru
      _
    // Predicated region
    $region6: #{tpu_custom_call.1} parent=1 // pred_check
      _
    $region7: #{tpu_custom_call.1} parent=1 // pred_check_branch
      %25 = sbr.rel (0) target = $region9
    $region8: #{tpu_custom_call.1} parent=1 // pred_region
      %s27 = ssub.s32 1024, 1024
      %28 = vsyncadd [#allocation6], %s27
      %s29 = sshll.u32 [#allocation5], 4
      %s30 = int_to_ptr.vmem [resolvable:$true] %s29
      %35 = dma.hbm_to_vmem [thread:$0]  %s1, 1024, %s30, [#allocation6], 64, 64, 4
    $region9: #{tpu_custom_call.1} parent=1 // pred_fallthru
      _
    // Predicated region
    $region10: #{tpu_custom_call.1} parent=1 // pred_check
      _
    $region11: #{tpu_custom_call.1} parent=1 // pred_check_branch
      %37 = sbr.rel (0) target = $region13
    $region12: #{tpu_custom_call.1} parent=1 // pred_region
      _
    $region13: #{tpu_custom_call.1} parent=1 // pred_fallthru
      _
    // Predicated region
    $region14: #{tpu_custom_call.1} parent=1 // pred_check
      _
    $region15: #{tpu_custom_call.1} parent=1 // pred_check_branch
      %39 = sbr.rel (0) target = $region17
    $region16: #{tpu_custom_call.1} parent=1 // pred_region
      _
    $region17: #{tpu_custom_call.1} parent=1 // pred_fallthru
      _
    // Predicated region
    $region18: #{tpu_custom_call.1} parent=1 // pred_check
      _
    $region19: #{tpu_custom_call.1} parent=1 // pred_check_branch
      %41 = sbr.rel (0) target = $region21
    $region20: #{tpu_custom_call.1} parent=1 // pred_region
      %42 = dma.done [#allocation3], 256
    $region21: #{tpu_custom_call.1} parent=1 // pred_fallthru
      _
    // Predicated region
    $region22: #{tpu_custom_call.1} parent=1 // pred_check
      _
    $region23: #{tpu_custom_call.1} parent=1 // pred_check_branch
      %44 = sbr.rel (0) target = $region25
    $region24: #{tpu_custom_call.1} parent=1 // pred_region
      %45 = dma.done [#allocation6], 1024
    $region25: #{tpu_custom_call.1} parent=1 // pred_fallthru
      _
    %v47 = vld [vmem:[#allocation2] sm:$0xff]
    %v48 = vld [vmem:[#allocation2 + $0x8] sm:$0xff]
    %v49 = vpack.c.bf16 %v48, %v47
    %v50 = vld [vmem:[#allocation5] sm:$0xf]
    %v51 = vld [vmem:[#allocation5 + $0x4] sm:$0xf]
    %v52 = vld [vmem:[#allocation5 + $0x8] sm:$0xf]
    %v53 = vld [vmem:[#allocation5 + $0xc] sm:$0xf]
    %v54 = vld [vmem:[#allocation5 + $0x10] sm:$0xf]
    %v55 = vld [vmem:[#allocation5 + $0x14] sm:$0xf]
    %v56 = vld [vmem:[#allocation5 + $0x18] sm:$0xf]
    %v57 = vld [vmem:[#allocation5 + $0x1c] sm:$0xf]
    %v58 = vld [vmem:[#allocation5 + $0x20] sm:$0xf]
    %v59 = vld [vmem:[#allocation5 + $0x24] sm:$0xf]
    %v60 = vld [vmem:[#allocation5 + $0x28] sm:$0xf]
    %v61 = vld [vmem:[#allocation5 + $0x2c] sm:$0xf]
    %v62 = vld [vmem:[#allocation5 + $0x30] sm:$0xf]
    %v63 = vld [vmem:[#allocation5 + $0x34] sm:$0xf]
    %v64 = vld [vmem:[#allocation5 + $0x38] sm:$0xf]
    %v65 = vld [vmem:[#allocation5 + $0x3c] sm:$0xf]
    %v66 = vld [vmem:[%s2] sm:$0x1]
    %v68 = vlaneseq
    %v69 = vshrl.u32 %v68, 7
    %v70 = vsub.s32 0, %v69
    %v71 = vrot.slane %v66, %v70
    %v89 = vunpack.c.l.b16 %v50
    %v90 = vunpack.c.l.b16 %v51
    %v91 = vunpack.c.l.b16 %v52
    %v92 = vunpack.c.l.b16 %v53
    %v93 = vunpack.c.l.b16 %v54
    %v94 = vunpack.c.l.b16 %v55
    %v95 = vunpack.c.l.b16 %v56
    %v96 = vunpack.c.l.b16 %v57
    %v97 = vunpack.c.l.b16 %v58
    %v98 = vunpack.c.l.b16 %v59
    %v99 = vunpack.c.l.b16 %v60
    %v100 = vunpack.c.l.b16 %v61
    %v101 = vunpack.c.l.b16 %v62
    %v102 = vunpack.c.l.b16 %v63
    %v103 = vunpack.c.l.b16 %v64
    %v104 = vunpack.c.l.b16 %v65
    %v105 = vpack.c.b16 %v90, %v89
    %v106 = vpack.c.b16 %v92, %v91
    %v107 = vpack.c.b16 %v94, %v93
    %v108 = vpack.c.b16 %v96, %v95
    %v109 = vpack.c.b16 %v98, %v97
    %v110 = vpack.c.b16 %v100, %v99
    %v111 = vpack.c.b16 %v102, %v101
    %v112 = vpack.c.b16 %v104, %v103
    %121 = vmatprep.subr.bf16.mxu0 0
    %122 = vmatpush1.bf16.msra.mxu0 %v105
    %123 = vmatprep.subr.bf16.mxu0 0
    %124 = vmatpush1.bf16.msra.mxu0 %v106
    %125 = vmatprep.subr.bf16.mxu0 0
    %126 = vmatpush1.bf16.msra.mxu0 %v107
    %127 = vmatprep.subr.bf16.mxu0 0
    %128 = vmatpush1.bf16.msra.mxu0 %v108
    %129 = vmatprep.subr.bf16.mxu0 0
    %130 = vmatpush1.bf16.msra.mxu0 %v109
    %131 = vmatprep.subr.bf16.mxu0 0
    %132 = vmatpush1.bf16.msra.mxu0 %v110
    %133 = vmatprep.subr.bf16.mxu0 0
    %134 = vmatpush1.bf16.msra.mxu0 %v111
    %135 = vmatprep.subr.bf16.mxu0 0
    %136 = vmatpush1.bf16.msra.mxu0 %v112
    %137 = vmatprep.subr.bf16.mxu0 0
    %138 = vmatpush1.bf16.msra.mxu0 0
    %139 = vmatprep.subr.bf16.mxu0 0
    %140 = vmatpush1.bf16.msra.mxu0 0
    %141 = vmatprep.subr.bf16.mxu0 0
    %142 = vmatpush1.bf16.msra.mxu0 0
    %143 = vmatprep.subr.bf16.mxu0 0
    %144 = vmatpush1.bf16.msra.mxu0 0
    %145 = vmatprep.subr.bf16.mxu0 0
    %146 = vmatpush1.bf16.msra.mxu0 0
    %147 = vmatprep.subr.bf16.mxu0 0
    %148 = vmatpush1.bf16.msra.mxu0 0
    %149 = vmatprep.subr.bf16.mxu0 0
    %150 = vmatpush1.bf16.msra.mxu0 0
    %151 = vmatprep.subr.bf16.mxu0 0
    %152 = vmatpush1.bf16.msra.mxu0 0
    %153 = vmatprep.mubr.bf16.mxu0 0
    %154 = vmatmul.mubr.bf16.gmra.mrb[0].mxu0 %v49
    %v155 = vpop.f32.mrb[0].mxu0
    %v156 = vadd.f32 %v71, %v155
    %v157 = vpop.f32.mrb[0].mxu0
    %v158 = vpop.f32.mrb[0].mxu0
    %v159 = vadd.f32 %v71, %v158
    %v160 = vpop.f32.mrb[0].mxu0
    %161 = vdwg.mxu0
    %v162 = vtanh.pop %v156
    %v163 = vtanh.pop %v159
    %v164 = vld [vmem:[%s3] sm:$0x1]
    %v166 = vlaneseq
    %v167 = vshrl.u32 %v166, 7
    %v168 = vsub.s32 0, %v167
    %v169 = vrot.slane %v164, %v168
    %v171 = vmul.f32 %v162, %v169
    %v172 = vmul.f32 %v163, %v169
    %173 = vadd.xlane.f32.xlu0 %v171
    %v174 = vpop.xlane.xlu0 %173
    %175 = vadd.xlane.f32.xlu0 %v172
    %v176 = vpop.xlane.xlu0 %175
    %v179 = vlaneseq
    %v180 = vand.u32 %v179, 127
    %v181 = vlaneseq
    %v182 = vshrl.u32 %v181, 7
    %v183 = vsub.s32 %v180, %v182
    %v184 = vrot.slane %v174, %v183
    %v185 = vlaneseq
    %v186 = vshrl.u32 %v185, 7
    %v187 = vsub.s32 %v180, %v186
    %v188 = vrot.slane %v176, %v187
    %vm189 = vcmask 1041409
    %v190 = vsel %vm189, %v188, %v184
    %vm192 = vcmask 58368
    %v193 = vsel %vm192, %v190, -inf
    %194 = vmax.xlane.f32.xlu0 %v193
    %v195 = vpop.xlane.xlu0 %194
    %v197 = vlaneseq
    %v198 = vshrl.u32 %v197, 7
    %v199 = vsub.s32 0, %v198
    %v200 = vrot.slane %v195, %v199
    %v201 = vlaneseq
    %v202 = vshrl.u32 %v201, 7
    %v203 = vsub.s32 1, %v202
    %v204 = vrot.slane %v195, %v203
    %v207 = vsub.f32 %v174, %v200
    %v208 = vsub.f32 %v176, %v204
    %v209 = vmul.f32 %v207, 1.442695
    %v210 = vpow.pop %v209
    %v211 = vmul.f32 %v208, 1.442695
    %v212 = vpow.pop %v211
    %215 = vset.pattern.permute.xlu0 0
    %216 = vperm.xlu0 %215, %v210
    %v217 = vpop.permute.xlu0 %216
    %218 = vset.pattern.permute.xlu0 0
    %219 = vperm.xlu0 %218, %v212
    %v220 = vpop.permute.xlu0 %219
    %v221 = vlaneseq
    %v222 = vshrl.u32 %v221, 7
    %v223 = vsub.s32 %v180, %v222
    %v224 = vrot.slane %v217, %v223
    %v225 = vlaneseq
    %v226 = vshrl.u32 %v225, 7
    %v227 = vsub.s32 %v180, %v226
    %v228 = vrot.slane %v220, %v227
    %v229 = vsel %vm189, %v228, %v224
    %v231 = vsel %vm192, %v229, 0.0
    %232 = vadd.xlane.f32.xlu0 %v231
    %v233 = vpop.xlane.xlu0 %232
    %v234 = vrcp.pop %v233
    %v236 = vlaneseq
    %v237 = vshrl.u32 %v236, 7
    %v238 = vsub.s32 0, %v237
    %v239 = vrot.slane %v234, %v238
    %v240 = vlaneseq
    %v241 = vshrl.u32 %v240, 7
    %v242 = vsub.s32 1, %v241
    %v243 = vrot.slane %v234, %v242
    %v246 = vmul.f32 %v210, %v239
    %v247 = vmul.f32 %v212, %v243
    %249 = vset.pattern.permute.xlu0 0
    %250 = vperm.xlu0 %249, %v246
    %v251 = vpop.permute.xlu0 %250
    %254 = vset.pattern.permute.xlu0 0
    %255 = vperm.xlu0 %254, %v247
    %v256 = vpop.permute.xlu0 %255
    %v258 = vmul.f32 %v47, %v251
    %v259 = vmul.f32 %v48, %v256
    %v260 = vrot.slane %v258, 4
    %v261 = vadd.f32 %v258, %v260
    %v262 = vrot.slane %v261, 2
    %v263 = vadd.f32 %v261, %v262
    %v264 = vrot.slane %v263, 1
    %v265 = vadd.f32 %v263, %v264
    %v266 = vrot.slane %v259, 4
    %v267 = vadd.f32 %v259, %v266
    %v268 = vrot.slane %v267, 2
    %v269 = vadd.f32 %v267, %v268
    %v270 = vrot.slane %v269, 1
    %v271 = vadd.f32 %v269, %v270
    %v274 = vsel %vm189, %v271, %v265
    %276 = vst [vmem:[#allocation7] sm:$0x3] %v274
    // Predicated region
    $region26: #{tpu_custom_call.1} parent=1 // pred_check
      _
    $region27: #{tpu_custom_call.1} parent=1 // pred_check_branch
      %278 = sbr.rel (0) target = $region29
    $region28: #{tpu_custom_call.1} parent=1 // pred_region
      %s280 = ssub.s32 32, 32
      %281 = vsyncadd [#allocation4], %s280
      %s283 = sshll.u32 [#allocation7], 4
      %s284 = int_to_ptr.vmem [resolvable:$true] %s283
      %286 = dma.vmem_to_hbm [thread:$0]  %s284, 32, %s4, [#allocation4]
    $region29: #{tpu_custom_call.1} parent=1 // pred_fallthru
      _
    // Predicated region
    $region30: #{tpu_custom_call.1} parent=1 // pred_check
      _
    $region31: #{tpu_custom_call.1} parent=1 // pred_check_branch
      %288 = sbr.rel (0) target = $region33
    $region32: #{tpu_custom_call.1} parent=1 // pred_region
      %289 = dma.done [#allocation4], 32
    $region33: #{tpu_custom_call.1} parent=1 // pred_fallthru
      _
    %290 = vsyncpa [#allocation3], 1
    %291 = vsyncpa [#allocation6], 1
    %292 = vsyncpa [#allocation4], 1

</llo_original>
